<compile_context>
chip_gen: v5e
topology: v5e:2x2
jax: 0.10.0
libtpu: 0.0.40
codegen_flags: <defaults>
</compile_context>

<pallas_src>
import functools

import numpy as np
import jax
import jax.numpy as jnp
from jax.experimental import pallas as pl
from jax.experimental.pallas import tpu as pltpu

# ---- module hyper-parameters (mirror MLP.__init__) -------------------------
INPUT_DIM = 4
OUTPUT_DIM = 8
HIDDEN_LAYERS = 2
HIDDEN_SIZE = 128
L = 7                                   # PositionalMapping L
SCALE = 1.0                             # scale==1.0 -> *SCALE / /SCALE elided
NEG_SLOPE = 0.2
PI = 3.1415927410125732                 # exact constant used by the torch code

MAPPED_DIM = INPUT_DIM * (2 * L + 1)    # 4 * 15 = 60
GROUPS = 2 * L + 2                      # identity + 2L trig + 1 zero-pad = 16
MAPPED_PAD = INPUT_DIM * GROUPS         # 64 (sublane-aligned K for matmul #1)
OUT_PAD = 128                           # lane-dense output (sliced to 8)

TILE_M = 512                            # rows per grid step (mult. of 8)


def _round_up(n, m):
    return ((n + m - 1) // m) * m


def _build_mapping_constants():
    """Per-lane frequency / selector tables for the vectorized NeRF mapping.

    Column j -> group g = j // INPUT_DIM, feature d = j % INPUT_DIM.
      g == 0        : identity (h = x)
      g in [1, 2L]  : i = (g-1)//2 ; even offset -> sin(2^i*pi*x), odd -> cos
      g == 2L+1     : zero padding (matching zero rows appended to W1)
    """
    freqs = np.zeros((1, MAPPED_PAD), np.float32)
    sel_id = np.zeros((1, MAPPED_PAD), np.float32)
    sel_cos = np.zeros((1, MAPPED_PAD), np.float32)
    for j in range(MAPPED_PAD):
        g = j // INPUT_DIM
        if g == 0:
            sel_id[0, j] = 1.0
        elif g <= 2 * L:
            i = (g - 1) // 2
            freqs[0, j] = (2.0 ** i) * PI
            if (g - 1) % 2 == 1:
                sel_cos[0, j] = 1.0
        # g == 2L+1: stays zero -> sin(0)=0 and W1 pad rows are zero anyway.
    return freqs, sel_id, sel_cos


_FREQ_NP, _SEL_ID_NP, _SEL_COS_NP = _build_mapping_constants()


def _leaky_relu(x, negative_slope):
    return jnp.where(x >= 0, x, negative_slope * x)


def mlp_kernel(x_ref, freq_ref, selid_ref, selcos_ref,
               w1_ref, b1_ref, w2_ref, b2_ref, w3_ref, b3_ref,
               w4_ref, b4_ref, o_ref, *, compute_dtype):
    # ---- PositionalMapping (scale == 1.0), lane-dense -----------------------
    x = x_ref[...]                                  # (TM, 4) f32
    xr = x
    for _ in range(4):                              # 4 -> 8 -> 16 -> 32 -> 64
        xr = jnp.concatenate([xr, xr], axis=-1)     # x replicated per group
    z = xr * freq_ref[...]                          # (TM, 64)
    trig = jnp.where(selcos_ref[...] != 0.0, jnp.cos(z), jnp.sin(z))
    h = jnp.where(selid_ref[...] != 0.0, xr, trig)  # (TM, 64) mapped features

    # ---- dense layers --------------------------------------------------------
    def dense(a, w_ref, b_ref):
        w = w_ref[...]
        if compute_dtype != jnp.float32:            # bf16 MXU operands (v6e/v7x)
            a = a.astype(compute_dtype)
            w = w.astype(compute_dtype)
        return jnp.dot(a, w, preferred_element_type=jnp.float32) + b_ref[...]

    h = _leaky_relu(dense(h, w1_ref, b1_ref), NEG_SLOPE)   # (TM, 128)
    h = _leaky_relu(dense(h, w2_ref, b2_ref), NEG_SLOPE)   # (TM, 128)
    h = _leaky_relu(dense(h, w3_ref, b3_ref), NEG_SLOPE)   # (TM, 128)
    o_ref[...] = dense(h, w4_ref, b4_ref).astype(o_ref.dtype)  # (TM, 128 pad)


def init_params(key):
    """Deterministic PyTorch-style (uniform +-1/sqrt(fan_in)) init, (in,out)."""
    dims = [MAPPED_DIM] + [HIDDEN_SIZE] * (HIDDEN_LAYERS + 1) + [OUTPUT_DIM]
    params = []
    for i in range(len(dims) - 1):
        fan_in, fan_out = dims[i], dims[i + 1]
        key, kw, kb = jax.random.split(key, 3)
        bound = 1.0 / jnp.sqrt(jnp.float32(fan_in))
        w = jax.random.uniform(kw, (fan_in, fan_out), jnp.float32, -bound, bound)
        b = jax.random.uniform(kb, (1, fan_out), jnp.float32, -bound, bound)
        params.append((w, b))
    return params


@functools.partial(jax.jit, static_argnames=("use_bf16",))
def mlp_forward(x, params, use_bf16=False):
    """x: (batch, num_tokens, state_dim) | (rows, state_dim) | (state_dim,)."""
    # Flatten leading dims exactly like the PyTorch module (which returns the
    # flattened (rows, out) result: it never sets self.output_dim, so the
    # reshape-back branch in torch is dead code).
    if x.ndim == 3:
        b_, t_, d_ = x.shape
        x2 = x.reshape(b_ * t_, d_)
    elif x.ndim == 2:
        x2 = x
    elif x.ndim == 1:
        x2 = x[None, :]
    else:
        x2 = x.reshape(-1, x.shape[-1])

    n_rows = x2.shape[0]
    tm = min(TILE_M, _round_up(max(n_rows, 1), 8))
    padded_rows = _round_up(n_rows, tm)
    n_tiles = padded_rows // tm

    x_pad = jnp.pad(x2.astype(jnp.float32), ((0, padded_rows - n_rows), (0, 0)))

    (w1, b1), (w2, b2), (w3, b3), (w4, b4) = params
    w1p = jnp.pad(w1, ((0, MAPPED_PAD - MAPPED_DIM), (0, 0)))     # (64, 128)
    w4p = jnp.pad(w4, ((0, 0), (0, OUT_PAD - OUTPUT_DIM)))        # (128, 128)
    b4p = jnp.pad(b4, ((0, 0), (0, OUT_PAD - OUTPUT_DIM)))        # (1, 128)

    freqs = jnp.asarray(_FREQ_NP)
    sel_id = jnp.asarray(_SEL_ID_NP)
    sel_cos = jnp.asarray(_SEL_COS_NP)

    inputs = (x_pad, freqs, sel_id, sel_cos,
              w1p, b1, w2, b2, w3, b3, w4p, b4p)

    def const_spec(arr):
        return pl.BlockSpec(arr.shape, lambda i: (0, 0))

    in_specs = [pl.BlockSpec((tm, INPUT_DIM), lambda i: (i, 0))]
    in_specs += [const_spec(a) for a in inputs[1:]]
    out_specs = pl.BlockSpec((tm, OUT_PAD), lambda i: (i, 0))

    # Advisory cost estimate so XLA can schedule around the kernel.
    param_elems = sum(int(np.prod(a.shape)) for a in inputs[1:])
    flops = 2 * padded_rows * (MAPPED_PAD * HIDDEN_SIZE
                               + HIDDEN_LAYERS * HIDDEN_SIZE * HIDDEN_SIZE
                               + HIDDEN_SIZE * OUT_PAD)
    cost = pl.CostEstimate(
        flops=flops,
        transcendentals=2 * padded_rows * MAPPED_PAD,
        bytes_accessed=4 * (padded_rows * (INPUT_DIM + OUT_PAD) + param_elems),
    )

    kernel = functools.partial(
        mlp_kernel,
        compute_dtype=jnp.bfloat16 if use_bf16 else jnp.float32)

    out_pad = pl.pallas_call(
        kernel,
        out_shape=jax.ShapeDtypeStruct((padded_rows, OUT_PAD), jnp.float32),
        grid=(n_tiles,),
        in_specs=in_specs,
        out_specs=out_specs,
        compiler_params=pltpu.CompilerParams(
            dimension_semantics=("parallel",)),
        cost_estimate=cost,
    )(*inputs)

    return out_pad[:n_rows, :OUTPUT_DIM]


def reference_forward(x, params):
    """Pure-JAX reference matching the PyTorch forward semantics."""
    if x.ndim == 3:
        b_, t_, d_ = x.shape
        x = x.reshape(b_ * t_, d_)
    elif x.ndim == 1:
        x = x[None, :]
    x = x * SCALE
    parts = [x]
    for i in range(L):
        parts.append(jnp.sin((2.0 ** i) * PI * x))
        parts.append(jnp.cos((2.0 ** i) * PI * x))
    h = jnp.concatenate(parts, axis=-1) / SCALE
    for w, b_ in params[:-1]:
        h = h @ w + b_
        h = jnp.where(h >= 0, h, NEG_SLOPE * h)
    w, b_ = params[-1]
    return h @ w + b_


if __name__ == "__main__":
    key = jax.random.PRNGKey(0)
    k_params, k_x = jax.random.split(key)

    params = init_params(k_params)

    batch, num_tokens = 2, 8
    x = jax.random.normal(k_x, (batch, num_tokens, INPUT_DIM), jnp.float32)

    ref = reference_forward(x, params)

    # Exact (f32) path.
    out = jax.block_until_ready(mlp_forward(x, params, use_bf16=False))
    assert out.shape == (batch * num_tokens, OUTPUT_DIM)
    assert jnp.allclose(out, ref, atol=1e-4, rtol=1e-4), "f32 mismatch vs reference"

    # bf16-MXU path (v6e/v7x peak throughput); loose tolerance by construction.
    out_bf16 = jax.block_until_ready(mlp_forward(x, params, use_bf16=True))
    assert out_bf16.shape == (batch * num_tokens, OUTPUT_DIM)
    assert jnp.allclose(out_bf16, ref, atol=1e-1, rtol=1e-1), "bf16 mismatch vs reference"

    print("KERNEL_OK")
</pallas_src>

<mosaic_0001>
module attributes {stable_mosaic.version = 11 : i64} {
  func.func @mlp_kernel(%arg0: i32, %arg1: memref<16x4xf32, #tpu.memory_space<vmem>>, %arg2: memref<1x64xf32, #tpu.memory_space<vmem>>, %arg3: memref<1x64xf32, #tpu.memory_space<vmem>>, %arg4: memref<1x64xf32, #tpu.memory_space<vmem>>, %arg5: memref<64x128xf32, #tpu.memory_space<vmem>>, %arg6: memref<1x128xf32, #tpu.memory_space<vmem>>, %arg7: memref<128x128xf32, #tpu.memory_space<vmem>>, %arg8: memref<1x128xf32, #tpu.memory_space<vmem>>, %arg9: memref<128x128xf32, #tpu.memory_space<vmem>>, %arg10: memref<1x128xf32, #tpu.memory_space<vmem>>, %arg11: memref<128x128xf32, #tpu.memory_space<vmem>>, %arg12: memref<1x128xf32, #tpu.memory_space<vmem>>, %arg13: memref<16x128xf32, #tpu.memory_space<vmem>>) attributes {dimension_semantics = [#tpu.dimension_semantics<parallel>], iteration_bounds = array<i64: 1>, scalar_prefetch = 0 : i64, scratch_operands = 0 : i64, tpu.core_type = #tpu.core_type<tc>, window_params = [{transform_indices = @transform_0, window_bounds = array<i64: 16, 4>}, {pipeline_mode = #tpu.pipeline_mode<synchronous>, transform_indices = @transform_1, window_bounds = array<i64: 1, 64>}, {pipeline_mode = #tpu.pipeline_mode<synchronous>, transform_indices = @transform_2, window_bounds = array<i64: 1, 64>}, {pipeline_mode = #tpu.pipeline_mode<synchronous>, transform_indices = @transform_3, window_bounds = array<i64: 1, 64>}, {pipeline_mode = #tpu.pipeline_mode<synchronous>, transform_indices = @transform_4, window_bounds = array<i64: 64, 128>}, {pipeline_mode = #tpu.pipeline_mode<synchronous>, transform_indices = @transform_5, window_bounds = array<i64: 1, 128>}, {pipeline_mode = #tpu.pipeline_mode<synchronous>, transform_indices = @transform_6, window_bounds = array<i64: 128, 128>}, {pipeline_mode = #tpu.pipeline_mode<synchronous>, transform_indices = @transform_7, window_bounds = array<i64: 1, 128>}, {pipeline_mode = #tpu.pipeline_mode<synchronous>, transform_indices = @transform_8, window_bounds = array<i64: 128, 128>}, {pipeline_mode = #tpu.pipeline_mode<synchronous>, transform_indices = @transform_9, window_bounds = array<i64: 1, 128>}, {pipeline_mode = #tpu.pipeline_mode<synchronous>, transform_indices = @transform_10, window_bounds = array<i64: 128, 128>}, {pipeline_mode = #tpu.pipeline_mode<synchronous>, transform_indices = @transform_11, window_bounds = array<i64: 1, 128>}, {transform_indices = @transform_12, window_bounds = array<i64: 16, 128>}]} {
    %c0 = arith.constant 0 : index
    %c0_0 = arith.constant 0 : index
    %0 = vector.load %arg1[%c0, %c0_0] : memref<16x4xf32, #tpu.memory_space<vmem>>, vector<16x4xf32>
    %1 = tpu.concatenate %0, %0 in 1 : vector<16x4xf32>, vector<16x4xf32> -> vector<16x8xf32>
    %2 = tpu.concatenate %1, %1 in 1 : vector<16x8xf32>, vector<16x8xf32> -> vector<16x16xf32>
    %3 = tpu.concatenate %2, %2 in 1 : vector<16x16xf32>, vector<16x16xf32> -> vector<16x32xf32>
    %4 = tpu.concatenate %3, %3 in 1 : vector<16x32xf32>, vector<16x32xf32> -> vector<16x64xf32>
    %c0_1 = arith.constant 0 : index
    %c0_2 = arith.constant 0 : index
    %5 = vector.load %arg2[%c0_1, %c0_2] : memref<1x64xf32, #tpu.memory_space<vmem>>, vector<1x64xf32>
    %6 = vector.broadcast %5 : vector<1x64xf32> to vector<16x64xf32>
    %7 = arith.mulf %4, %6 : vector<16x64xf32>
    %c0_3 = arith.constant 0 : index
    %c0_4 = arith.constant 0 : index
    %8 = vector.load %arg4[%c0_3, %c0_4] : memref<1x64xf32, #tpu.memory_space<vmem>>, vector<1x64xf32>
    %cst = arith.constant 0.000000e+00 : f32
    %9 = vector.broadcast %cst : f32 to vector<1x64xf32>
    %10 = arith.cmpf one, %8, %9 : vector<1x64xf32>
    %11 = math.cos %7 : vector<16x64xf32>
    %12 = math.sin %7 : vector<16x64xf32>
    %13 = vector.shape_cast %10 : vector<1x64xi1> to vector<1x64xi1>
    %14 = vector.broadcast %13 : vector<1x64xi1> to vector<16x64xi1>
    %15 = arith.select %14, %11, %12 : vector<16x64xi1>, vector<16x64xf32>
    %c0_5 = arith.constant 0 : index
    %c0_6 = arith.constant 0 : index
    %16 = vector.load %arg3[%c0_5, %c0_6] : memref<1x64xf32, #tpu.memory_space<vmem>>, vector<1x64xf32>
    %cst_7 = arith.constant 0.000000e+00 : f32
    %17 = vector.broadcast %cst_7 : f32 to vector<1x64xf32>
    %18 = arith.cmpf one, %16, %17 : vector<1x64xf32>
    %19 = vector.shape_cast %18 : vector<1x64xi1> to vector<1x64xi1>
    %20 = vector.broadcast %19 : vector<1x64xi1> to vector<16x64xi1>
    %21 = arith.select %20, %4, %15 : vector<16x64xi1>, vector<16x64xf32>
    %c0_8 = arith.constant 0 : index
    %c0_9 = arith.constant 0 : index
    %22 = vector.load %arg5[%c0_8, %c0_9] : memref<64x128xf32, #tpu.memory_space<vmem>>, vector<64x128xf32>
    %cst_10 = arith.constant dense<0.000000e+00> : vector<16x128xf32>
    %23 = tpu.matmul %21, %22, %cst_10 {dimension_numbers = #tpu.dot_dimension_numbers<[1], [0], [0], [1], [0, 0, 1, 1], [], []>} : vector<16x64xf32>, vector<64x128xf32>, vector<16x128xf32> -> vector<16x128xf32>
    %c0_11 = arith.constant 0 : index
    %c0_12 = arith.constant 0 : index
    %24 = vector.load %arg6[%c0_11, %c0_12] : memref<1x128xf32, #tpu.memory_space<vmem>>, vector<1x128xf32>
    %25 = vector.broadcast %24 : vector<1x128xf32> to vector<16x128xf32>
    %26 = arith.addf %23, %25 : vector<16x128xf32>
    %cst_13 = arith.constant 0.000000e+00 : f32
    %27 = vector.broadcast %cst_13 : f32 to vector<16x128xf32>
    %28 = arith.cmpf oge, %26, %27 : vector<16x128xf32>
    %cst_14 = arith.constant 2.000000e-01 : f32
    %29 = vector.broadcast %cst_14 : f32 to vector<16x128xf32>
    %30 = arith.mulf %29, %26 : vector<16x128xf32>
    %31 = arith.select %28, %26, %30 : vector<16x128xi1>, vector<16x128xf32>
    %c0_15 = arith.constant 0 : index
    %c0_16 = arith.constant 0 : index
    %32 = vector.load %arg7[%c0_15, %c0_16] : memref<128x128xf32, #tpu.memory_space<vmem>>, vector<128x128xf32>
    %cst_17 = arith.constant dense<0.000000e+00> : vector<16x128xf32>
    %33 = tpu.matmul %31, %32, %cst_17 {dimension_numbers = #tpu.dot_dimension_numbers<[1], [0], [0], [1], [0, 0, 1, 1], [], []>} : vector<16x128xf32>, vector<128x128xf32>, vector<16x128xf32> -> vector<16x128xf32>
    %c0_18 = arith.constant 0 : index
    %c0_19 = arith.constant 0 : index
    %34 = vector.load %arg8[%c0_18, %c0_19] : memref<1x128xf32, #tpu.memory_space<vmem>>, vector<1x128xf32>
    %35 = vector.broadcast %34 : vector<1x128xf32> to vector<16x128xf32>
    %36 = arith.addf %33, %35 : vector<16x128xf32>
    %cst_20 = arith.constant 0.000000e+00 : f32
    %37 = vector.broadcast %cst_20 : f32 to vector<16x128xf32>
    %38 = arith.cmpf oge, %36, %37 : vector<16x128xf32>
    %cst_21 = arith.constant 2.000000e-01 : f32
    %39 = vector.broadcast %cst_21 : f32 to vector<16x128xf32>
    %40 = arith.mulf %39, %36 : vector<16x128xf32>
    %41 = arith.select %38, %36, %40 : vector<16x128xi1>, vector<16x128xf32>
    %c0_22 = arith.constant 0 : index
    %c0_23 = arith.constant 0 : index
    %42 = vector.load %arg9[%c0_22, %c0_23] : memref<128x128xf32, #tpu.memory_space<vmem>>, vector<128x128xf32>
    %cst_24 = arith.constant dense<0.000000e+00> : vector<16x128xf32>
    %43 = tpu.matmul %41, %42, %cst_24 {dimension_numbers = #tpu.dot_dimension_numbers<[1], [0], [0], [1], [0, 0, 1, 1], [], []>} : vector<16x128xf32>, vector<128x128xf32>, vector<16x128xf32> -> vector<16x128xf32>
    %c0_25 = arith.constant 0 : index
    %c0_26 = arith.constant 0 : index
    %44 = vector.load %arg10[%c0_25, %c0_26] : memref<1x128xf32, #tpu.memory_space<vmem>>, vector<1x128xf32>
    %45 = vector.broadcast %44 : vector<1x128xf32> to vector<16x128xf32>
    %46 = arith.addf %43, %45 : vector<16x128xf32>
    %cst_27 = arith.constant 0.000000e+00 : f32
    %47 = vector.broadcast %cst_27 : f32 to vector<16x128xf32>
    %48 = arith.cmpf oge, %46, %47 : vector<16x128xf32>
    %cst_28 = arith.constant 2.000000e-01 : f32
    %49 = vector.broadcast %cst_28 : f32 to vector<16x128xf32>
    %50 = arith.mulf %49, %46 : vector<16x128xf32>
    %51 = arith.select %48, %46, %50 : vector<16x128xi1>, vector<16x128xf32>
    %c0_29 = arith.constant 0 : index
    %c0_30 = arith.constant 0 : index
    %52 = vector.load %arg11[%c0_29, %c0_30] : memref<128x128xf32, #tpu.memory_space<vmem>>, vector<128x128xf32>
    %cst_31 = arith.constant dense<0.000000e+00> : vector<16x128xf32>
    %53 = tpu.matmul %51, %52, %cst_31 {dimension_numbers = #tpu.dot_dimension_numbers<[1], [0], [0], [1], [0, 0, 1, 1], [], []>} : vector<16x128xf32>, vector<128x128xf32>, vector<16x128xf32> -> vector<16x128xf32>
    %c0_32 = arith.constant 0 : index
    %c0_33 = arith.constant 0 : index
    %54 = vector.load %arg12[%c0_32, %c0_33] : memref<1x128xf32, #tpu.memory_space<vmem>>, vector<1x128xf32>
    %55 = vector.broadcast %54 : vector<1x128xf32> to vector<16x128xf32>
    %56 = arith.addf %53, %55 : vector<16x128xf32>
    %c0_34 = arith.constant 0 : index
    %c0_35 = arith.constant 0 : index
    %57 = vector.load %arg13[%c0_34, %c0_35] : memref<16x128xf32, #tpu.memory_space<vmem>>, vector<16x128xf32>
    tpu.vector_store %arg13[%c0_34, %c0_35], %56 {strides = array<i32>} : memref<16x128xf32, #tpu.memory_space<vmem>>, vector<16x128xf32>,
    return
  }
  func.func @transform_0(%arg0: i32) -> (i32, i32) {
    %c0_i32 = arith.constant 0 : i32
    %c0_i32_0 = arith.constant 0 : i32
    return %arg0, %c0_i32 : i32, i32
  }
  func.func @transform_1(%arg0: i32) -> (i32, i32) {
    %c0_i32 = arith.constant 0 : i32
    %c0_i32_0 = arith.constant 0 : i32
    %c0_i32_1 = arith.constant 0 : i32
    return %c0_i32, %c0_i32_0 : i32, i32
  }
  func.func @transform_2(%arg0: i32) -> (i32, i32) {
    %c0_i32 = arith.constant 0 : i32
    %c0_i32_0 = arith.constant 0 : i32
    %c0_i32_1 = arith.constant 0 : i32
    return %c0_i32, %c0_i32_0 : i32, i32
  }
  func.func @transform_3(%arg0: i32) -> (i32, i32) {
    %c0_i32 = arith.constant 0 : i32
    %c0_i32_0 = arith.constant 0 : i32
    %c0_i32_1 = arith.constant 0 : i32
    return %c0_i32, %c0_i32_0 : i32, i32
  }
  func.func @transform_4(%arg0: i32) -> (i32, i32) {
    %c0_i32 = arith.constant 0 : i32
    %c0_i32_0 = arith.constant 0 : i32
    %c0_i32_1 = arith.constant 0 : i32
    return %c0_i32, %c0_i32_0 : i32, i32
  }
  func.func @transform_5(%arg0: i32) -> (i32, i32) {
    %c0_i32 = arith.constant 0 : i32
    %c0_i32_0 = arith.constant 0 : i32
    %c0_i32_1 = arith.constant 0 : i32
    return %c0_i32, %c0_i32_0 : i32, i32
  }
  func.func @transform_6(%arg0: i32) -> (i32, i32) {
    %c0_i32 = arith.constant 0 : i32
    %c0_i32_0 = arith.constant 0 : i32
    %c0_i32_1 = arith.constant 0 : i32
    return %c0_i32, %c0_i32_0 : i32, i32
  }
  func.func @transform_7(%arg0: i32) -> (i32, i32) {
    %c0_i32 = arith.constant 0 : i32
    %c0_i32_0 = arith.constant 0 : i32
    %c0_i32_1 = arith.constant 0 : i32
    return %c0_i32, %c0_i32_0 : i32, i32
  }
  func.func @transform_8(%arg0: i32) -> (i32, i32) {
    %c0_i32 = arith.constant 0 : i32
    %c0_i32_0 = arith.constant 0 : i32
    %c0_i32_1 = arith.constant 0 : i32
    return %c0_i32, %c0_i32_0 : i32, i32
  }
  func.func @transform_9(%arg0: i32) -> (i32, i32) {
    %c0_i32 = arith.constant 0 : i32
    %c0_i32_0 = arith.constant 0 : i32
    %c0_i32_1 = arith.constant 0 : i32
    return %c0_i32, %c0_i32_0 : i32, i32
  }
  func.func @transform_10(%arg0: i32) -> (i32, i32) {
    %c0_i32 = arith.constant 0 : i32
    %c0_i32_0 = arith.constant 0 : i32
    %c0_i32_1 = arith.constant 0 : i32
    return %c0_i32, %c0_i32_0 : i32, i32
  }
  func.func @transform_11(%arg0: i32) -> (i32, i32) {
    %c0_i32 = arith.constant 0 : i32
    %c0_i32_0 = arith.constant 0 : i32
    %c0_i32_1 = arith.constant 0 : i32
    return %c0_i32, %c0_i32_0 : i32, i32
  }
  func.func @transform_12(%arg0: i32) -> (i32, i32) {
    %c0_i32 = arith.constant 0 : i32
    %c0_i32_0 = arith.constant 0 : i32
    return %arg0, %c0_i32 : i32, i32
  }
}

</mosaic_0001>

<llo_original>
// kernel: mlp_forward.1
$region0: #{mlp_forward.1}
  #allocation0 [shape = 'u32[]', space=smem, size = 0x4, offset = 0x4, fixed_abs, tag = 'smem constant byte address 0x4 - core index']
  #allocation1 [shape = 'u32[72,128]{1,0:T(1,128)}', space=vmem, size = 0x9000, scoped, tag = 'internal scratch']
  %s0 = inlined_call_operand.vmem [shape: f32[16,4], index: 0, kind: input, shape index: {}]
  %s1 = inlined_call_operand.vmem [shape: f32[1,64], index: 1, kind: input, shape index: {}]
  %s2 = inlined_call_operand.vmem [shape: f32[1,64], index: 2, kind: input, shape index: {}]
  %s3 = inlined_call_operand.vmem [shape: f32[1,64], index: 3, kind: input, shape index: {}]
  %s4 = inlined_call_operand.vmem [shape: f32[64,128], index: 4, kind: input, shape index: {}]
  %s5 = inlined_call_operand.vmem [shape: f32[1,128], index: 5, kind: input, shape index: {}]
  %s6 = inlined_call_operand.vmem [shape: f32[128,128], index: 6, kind: input, shape index: {}]
  %s7 = inlined_call_operand.vmem [shape: f32[1,128], index: 7, kind: input, shape index: {}]
  %s8 = inlined_call_operand.vmem [shape: f32[128,128], index: 8, kind: input, shape index: {}]
  %s9 = inlined_call_operand.vmem [shape: f32[1,128], index: 9, kind: input, shape index: {}]
  %s10 = inlined_call_operand.vmem [shape: f32[128,128], index: 10, kind: input, shape index: {}]
  %s11 = inlined_call_operand.vmem [shape: f32[1,128], index: 11, kind: input, shape index: {}]
  %s12 = inlined_call_operand.vmem [shape: f32[16,128], index: 12, kind: output, shape index: {}]
  %s13 = sld [smem:[#allocation0]]
  $region58: #{mlp_forward.1} parent=0
    _
  %s15 = ssub.s32 1, %s13
  %s16 = scalar_select 0, %s15, %s13
  // Predicated region
  $region2: #{mlp_forward.1} parent=0 // pred_check
    _
  $region3: #{mlp_forward.1} parent=0 // pred_check_branch
    %18 = sbr.rel (0) target = $region5
  $region4: #{mlp_forward.1} parent=0 // pred_region
    _
  $region5: #{mlp_forward.1} parent=0 // pred_fallthru
    _
  // Predicated region
  $region6: #{mlp_forward.1} parent=0 // pred_check
    _
  $region7: #{mlp_forward.1} parent=0 // pred_check_branch
    %20 = sbr.rel (0) target = $region9
  $region8: #{mlp_forward.1} parent=0 // pred_region
    _
  $region9: #{mlp_forward.1} parent=0 // pred_fallthru
    _
  // Predicated region
  $region10: #{mlp_forward.1} parent=0 // pred_check
    _
  $region11: #{mlp_forward.1} parent=0 // pred_check_branch
    %22 = sbr.rel (0) target = $region13
  $region12: #{mlp_forward.1} parent=0 // pred_region
    _
  $region13: #{mlp_forward.1} parent=0 // pred_fallthru
    _
  // Predicated region
  $region14: #{mlp_forward.1} parent=0 // pred_check
    _
  $region15: #{mlp_forward.1} parent=0 // pred_check_branch
    %24 = sbr.rel (0) target = $region17
  $region16: #{mlp_forward.1} parent=0 // pred_region
    _
  $region17: #{mlp_forward.1} parent=0 // pred_fallthru
    _
  // Predicated region
  $region18: #{mlp_forward.1} parent=0 // pred_check
    _
  $region19: #{mlp_forward.1} parent=0 // pred_check_branch
    %26 = sbr.rel (0) target = $region21
  $region20: #{mlp_forward.1} parent=0 // pred_region
    _
  $region21: #{mlp_forward.1} parent=0 // pred_fallthru
    _
  // Predicated region
  $region22: #{mlp_forward.1} parent=0 // pred_check
    _
  $region23: #{mlp_forward.1} parent=0 // pred_check_branch
    %28 = sbr.rel (0) target = $region25
  $region24: #{mlp_forward.1} parent=0 // pred_region
    _
  $region25: #{mlp_forward.1} parent=0 // pred_fallthru
    _
  // Predicated region
  $region26: #{mlp_forward.1} parent=0 // pred_check
    _
  $region27: #{mlp_forward.1} parent=0 // pred_check_branch
    %30 = sbr.rel (0) target = $region29
  $region28: #{mlp_forward.1} parent=0 // pred_region
    _
  $region29: #{mlp_forward.1} parent=0 // pred_fallthru
    _
  // Predicated region
  $region30: #{mlp_forward.1} parent=0 // pred_check
    _
  $region31: #{mlp_forward.1} parent=0 // pred_check_branch
    %32 = sbr.rel (0) target = $region33
  $region32: #{mlp_forward.1} parent=0 // pred_region
    _
  $region33: #{mlp_forward.1} parent=0 // pred_fallthru
    _
  // Predicated region
  $region34: #{mlp_forward.1} parent=0 // pred_check
    _
  $region35: #{mlp_forward.1} parent=0 // pred_check_branch
    %34 = sbr.rel (0) target = $region37
  $region36: #{mlp_forward.1} parent=0 // pred_region
    _
  $region37: #{mlp_forward.1} parent=0 // pred_fallthru
    _
  // Predicated region
  $region38: #{mlp_forward.1} parent=0 // pred_check
    _
  $region39: #{mlp_forward.1} parent=0 // pred_check_branch
    %36 = sbr.rel (0) target = $region41
  $region40: #{mlp_forward.1} parent=0 // pred_region
    _
  $region41: #{mlp_forward.1} parent=0 // pred_fallthru
    _
  // Predicated region
  $region42: #{mlp_forward.1} parent=0 // pred_check
    _
  $region43: #{mlp_forward.1} parent=0 // pred_check_branch
    %38 = sbr.rel (0) target = $region45
  $region44: #{mlp_forward.1} parent=0 // pred_region
    _
  $region45: #{mlp_forward.1} parent=0 // pred_fallthru
    _
  // Predicated region
  $region46: #{mlp_forward.1} parent=0 // pred_check
    _
  $region47: #{mlp_forward.1} parent=0 // pred_check_branch
    %40 = sbr.rel (0) target = $region49
  $region48: #{mlp_forward.1} parent=0 // pred_region
    _
  $region49: #{mlp_forward.1} parent=0 // pred_fallthru
    _
  %v41 = vld [vmem:[%s0] sm:$0xff]
  %v42 = vld [vmem:[%s0 + $0x8] sm:$0xff]
  %45 = vrot.lane.b32.xlu0 %v41, 4
  %v46 = vpop.permute.xlu0 %45
  %47 = vrot.lane.b32.xlu0 %v42, 4
  %v48 = vpop.permute.xlu0 %47
  %vm51 = vcmask 31744
  %v52 = vsel %vm51, %v41, %v46
  %v53 = vsel %vm51, %v42, %v48
  %56 = vrot.lane.b32.xlu0 %v52, 8
  %v57 = vpop.permute.xlu0 %56
  %58 = vrot.lane.b32.xlu0 %v53, 8
  %v59 = vpop.permute.xlu0 %58
  %vm62 = vcmask 64512
  %v63 = vsel %vm62, %v52, %v57
  %v64 = vsel %vm62, %v53, %v59
  %67 = vrot.lane.b32.xlu0 %v63, 16
  %v68 = vpop.permute.xlu0 %67
  %69 = vrot.lane.b32.xlu0 %v64, 16
  %v70 = vpop.permute.xlu0 %69
  %vm73 = vcmask 130048
  %v74 = vsel %vm73, %v63, %v68
  %v75 = vsel %vm73, %v64, %v70
  %78 = vrot.lane.b32.xlu0 %v74, 32
  %v79 = vpop.permute.xlu0 %78
  %80 = vrot.lane.b32.xlu0 %v75, 32
  %v81 = vpop.permute.xlu0 %80
  %vm84 = vcmask 261120
  %v85 = vsel %vm84, %v74, %v79
  %v86 = vsel %vm84, %v75, %v81
  %v87 = vld [vmem:[%s1] sm:$0x1]
  %v89 = vperm.slane %v87, 0
  %v91 = vmul.f32 %v85, %v89
  %v92 = vmul.f32 %v86, %v89
  %v93 = vld [vmem:[%s3] sm:$0x1]
  %vm94 = vcmp.ne.f32.partialorder %v93, 0.0
  %v95 = vand.u32 2147483647, %v91
  %vm96 = vcmp.le.f32.partialorder %v95, 0.7853982
  %vm97 = vcmp.lt.s32.totalorder %v91, 0
  %v98 = vand.u32 %v91, 2139095040
  %v99 = vshrl.u32 %v98, 23
  %v100 = vsub.s32 %v99, 127
  %v101 = vand.u32 2147483647, %v91
  %v102 = vand.u32 %v101, 8388607
  %v103 = vor.u32 %v102, 8388608
  %v104 = vsub.s32 0, %v103
  %v105 = vadd.s32 %v100, 1
  %vm106 = vcmp.gt.s32.totalorder %v105, 0
  %v107 = vsel %vm106, %v105, 0
  %v108 = vshrl.u32 %v107, 5
  %v109 = vand.u32 %v107, 31
  %v110 = vsub.s32 32, %v109
  %v111 = vshrl.u32 683565275, %v110
  %v112 = vshll.u32 683565275, %v109
  %v113 = vshrl.u32 2475754826, %v110
  %v114 = vor.u32 %v112, %v113
  %v115 = vshll.u32 2475754826, %v109
  %v116 = vshrl.u32 2131351028, %v110
  %v117 = vor.u32 %v115, %v116
  %v118 = vshll.u32 2131351028, %v109
  %v119 = vshrl.u32 2102212464, %v110
  %v120 = vor.u32 %v118, %v119
  %v121 = vshll.u32 2102212464, %v109
  %v122 = vshrl.u32 920167782, %v110
  %v123 = vor.u32 %v121, %v122
  %v124 = vshll.u32 920167782, %v109
  %v125 = vshrl.u32 1326507024, %v110
  %v126 = vor.u32 %v124, %v125
  %vm127 = vcmp.lt.s32.totalorder %v108, 1
  %vm128 = vcmp.lt.s32.totalorder %v108, 2
  %vm129 = vcmp.lt.s32.totalorder %v108, 3
  %vm130 = vcmp.lt.s32.totalorder %v108, 4
  %v131 = vsel %vm127, %v111, %v114
  %v132 = vsel %vm130, %v120, 2102212464
  %v133 = vsel %vm129, %v117, %v132
  %v134 = vsel %vm128, %v131, %v133
  %v135 = vsel %vm127, %v114, %v117
  %v136 = vsel %vm130, %v123, 920167782
  %v137 = vsel %vm129, %v120, %v136
  %v138 = vsel %vm128, %v135, %v137
  %v139 = vsel %vm127, %v117, %v120
  %v140 = vsel %vm130, %v126, 1326507024
  %v141 = vsel %vm129, %v123, %v140
  %v142 = vsel %vm128, %v139, %v141
  %v143 = vshll.u32 %v103, 8
  %v144 = vand.u32 %v143, 65535
  %v145 = vshrl.u32 %v143, 16
  %v146 = vand.u32 %v142, 65535
  %v147 = vshrl.u32 %v142, 16
  %v148 = vmul.u32 %v144, %v146
  %v149 = vmul.u32 %v144, %v147
  %v150 = vmul.u32 %v145, %v146
  %v151 = vmul.u32 %v145, %v147
  %v152 = vshll.u32 %v149, 16
  %v153 = vshrl.u32 %v149, 16
  %v154 = vshll.u32 %v150, 16
  %v155 = vshrl.u32 %v150, 16
  %vm156 = vc.u32 %v148, %v152
  %v157 = vsel %vm156, 1, 0
  %v158 = vadd.s32 %v148, %v152
  %v159 = vadd.s32 %v151, %v157
  %vm160 = vc.u32 %v158, %v154
  %v161 = vsel %vm160, 1, 0
  %v162 = vadd.s32 %v158, %v154
  %v163 = vadd.s32 %v159, %v161
  %v164 = vadd.s32 %v163, %v153
  %v165 = vadd.s32 %v164, %v155
  %v166 = vand.u32 %v143, 65535
  %v167 = vshrl.u32 %v143, 16
  %v168 = vand.u32 %v138, 65535
  %v169 = vshrl.u32 %v138, 16
  %v170 = vmul.u32 %v166, %v168
  %v171 = vmul.u32 %v166, %v169
  %v172 = vmul.u32 %v167, %v168
  %v173 = vmul.u32 %v167, %v169
  %v174 = vshll.u32 %v171, 16
  %v175 = vshrl.u32 %v171, 16
  %v176 = vshll.u32 %v172, 16
  %v177 = vshrl.u32 %v172, 16
  %vm178 = vc.u32 %v170, %v174
  %v179 = vsel %vm178, 1, 0
  %v180 = vadd.s32 %v170, %v174
  %v181 = vadd.s32 %v173, %v179
  %vm182 = vc.u32 %v180, %v176
  %v183 = vsel %vm182, 1, 0
  %v184 = vadd.s32 %v180, %v176
  %v185 = vadd.s32 %v181, %v183
  %v186 = vadd.s32 %v185, %v175
  %v187 = vadd.s32 %v186, %v177
  %v188 = vmul.u32 %v143, %v134
  %v189 = vadd.s32 %v165, %v184
  %vm190 = vc.u32 %v165, %v184
  %v191 = vadd.s32 %v187, 1
  %v192 = vsel %vm190, %v191, %v187
  %v193 = vadd.s32 %v188, %v192
  %v194 = vadd.s32 %v193, 536870912
  %v195 = vshrl.u32 %v194, 30
  %v196 = vshll.u32 %v195, 30
  %v197 = vsub.s32 %v193, %v196
  %vm198 = vcmp.lt.s32.totalorder %v197, 0
  %v199 = vsub.s32 0, %v197
  %v200 = vsel %vm198, %v199, %v197
  %v201 = vclz %v200
  %v202 = vsub.s32 %v201, 2
  %vm203 = vcmp.gt.s32.totalorder 0, %v202
  %v204 = vsel %vm203, 0, %v202
  %v205 = vsub.s32 32, %v204
  %v206 = vshll.u32 %v197, %v204
  %v207 = vshrl.u32 %v189, %v205
  %v208 = vor.u32 %v206, %v207
  %v209 = vsub.s32 4294967266, %v204
  %v210 = vadd.s32 %v209, 127
  %v211 = vshll.u32 %v210, 23
  %v212 = vor.u32 4788187, %v211
  %v213 = vand.u32 2147483647, %v212
  %v215 = vcvt.s32.f32 %v208
  %v216 = vmul.f32 %v215, %v213
  %v217 = vxor.u32 %v216, 2147483648
  %v218 = vsel %vm97, %v217, %v216
  %v219 = vsub.s32 4, %v195
  %v220 = vsel %vm97, %v219, %v195
  %v221 = vsel %vm96, %v91, %v218
  %v222 = vsel %vm96, 0, %v220
  %v223 = vmul.f32 %v221, %v221
  %v224 = vmul.f32 %v223, -0.001358992
  %v225 = vadd.f32 %v224, 0.041655596
  %v226 = vmul.f32 %v223, %v225
  %v227 = vadd.f32 %v226, -0.4999988
  %v228 = vmul.f32 %v223, %v227
  %v229 = vadd.f32 1.0, %v228
  %v230 = vmul.f32 %v221, %v221
  %v231 = vmul.f32 %v230, -0.00019511016
  %v232 = vadd.f32 %v231, 0.008332121
  %v233 = vmul.f32 %v230, %v232
  %v234 = vadd.f32 %v233, -0.16666654
  %v235 = vmul.f32 %v230, %v234
  %v236 = vadd.f32 %v235, 1.0
  %v237 = vmul.f32 %v236, %v221
  %vm238 = vweird.f32 %v91
  %v239 = vand.u32 %v222, 3
  %vm240 = vcmp.lt.s32.totalorder %v239, 2
  %vm241 = vcmp.eq.s32.totalorder %v239, 0
  %v242 = vxor.u32 %v237, 2147483648
  %v243 = vsel %vm241, %v229, %v242
  %vm244 = vcmp.eq.s32.totalorder %v239, 2
  %v245 = vxor.u32 %v229, 2147483648
  %v246 = vsel %vm244, %v245, %v237
  %v247 = vsel %vm240, %v243, %v246
  %v248 = vsel %vm238, nan, %v247
  %v249 = vand.u32 2147483647, %v92
  %vm250 = vcmp.le.f32.partialorder %v249, 0.7853982
  %vm251 = vcmp.lt.s32.totalorder %v92, 0
  %v252 = vand.u32 %v92, 2139095040
  %v253 = vshrl.u32 %v252, 23
  %v254 = vsub.s32 %v253, 127
  %v255 = vand.u32 2147483647, %v92
  %v256 = vand.u32 %v255, 8388607
  %v257 = vor.u32 %v256, 8388608
  %v258 = vsub.s32 0, %v257
  %v259 = vadd.s32 %v254, 1
  %vm260 = vcmp.gt.s32.totalorder %v259, 0
  %v261 = vsel %vm260, %v259, 0
  %v262 = vshrl.u32 %v261, 5
  %v263 = vand.u32 %v261, 31
  %v264 = vsub.s32 32, %v263
  %v265 = vshrl.u32 683565275, %v264
  %v266 = vshll.u32 683565275, %v263
  %v267 = vshrl.u32 2475754826, %v264
  %v268 = vor.u32 %v266, %v267
  %v269 = vshll.u32 2475754826, %v263
  %v270 = vshrl.u32 2131351028, %v264
  %v271 = vor.u32 %v269, %v270
  %v272 = vshll.u32 2131351028, %v263
  %v273 = vshrl.u32 2102212464, %v264
  %v274 = vor.u32 %v272, %v273
  %v275 = vshll.u32 2102212464, %v263
  %v276 = vshrl.u32 920167782, %v264
  %v277 = vor.u32 %v275, %v276
  %v278 = vshll.u32 920167782, %v263
  %v279 = vshrl.u32 1326507024, %v264
  %v280 = vor.u32 %v278, %v279
  %vm281 = vcmp.lt.s32.totalorder %v262, 1
  %vm282 = vcmp.lt.s32.totalorder %v262, 2
  %vm283 = vcmp.lt.s32.totalorder %v262, 3
  %vm284 = vcmp.lt.s32.totalorder %v262, 4
  %v285 = vsel %vm281, %v265, %v268
  %v286 = vsel %vm284, %v274, 2102212464
  %v287 = vsel %vm283, %v271, %v286
  %v288 = vsel %vm282, %v285, %v287
  %v289 = vsel %vm281, %v268, %v271
  %v290 = vsel %vm284, %v277, 920167782
  %v291 = vsel %vm283, %v274, %v290
  %v292 = vsel %vm282, %v289, %v291
  %v293 = vsel %vm281, %v271, %v274
  %v294 = vsel %vm284, %v280, 1326507024
  %v295 = vsel %vm283, %v277, %v294
  %v296 = vsel %vm282, %v293, %v295
  %v297 = vshll.u32 %v257, 8
  %v298 = vand.u32 %v297, 65535
  %v299 = vshrl.u32 %v297, 16
  %v300 = vand.u32 %v296, 65535
  %v301 = vshrl.u32 %v296, 16
  %v302 = vmul.u32 %v298, %v300
  %v303 = vmul.u32 %v298, %v301
  %v304 = vmul.u32 %v299, %v300
  %v305 = vmul.u32 %v299, %v301
  %v306 = vshll.u32 %v303, 16
  %v307 = vshrl.u32 %v303, 16
  %v308 = vshll.u32 %v304, 16
  %v309 = vshrl.u32 %v304, 16
  %vm310 = vc.u32 %v302, %v306
  %v311 = vsel %vm310, 1, 0
  %v312 = vadd.s32 %v302, %v306
  %v313 = vadd.s32 %v305, %v311
  %vm314 = vc.u32 %v312, %v308
  %v315 = vsel %vm314, 1, 0
  %v316 = vadd.s32 %v312, %v308
  %v317 = vadd.s32 %v313, %v315
  %v318 = vadd.s32 %v317, %v307
  %v319 = vadd.s32 %v318, %v309
  %v320 = vand.u32 %v297, 65535
  %v321 = vshrl.u32 %v297, 16
  %v322 = vand.u32 %v292, 65535
  %v323 = vshrl.u32 %v292, 16
  %v324 = vmul.u32 %v320, %v322
  %v325 = vmul.u32 %v320, %v323
  %v326 = vmul.u32 %v321, %v322
  %v327 = vmul.u32 %v321, %v323
  %v328 = vshll.u32 %v325, 16
  %v329 = vshrl.u32 %v325, 16
  %v330 = vshll.u32 %v326, 16
  %v331 = vshrl.u32 %v326, 16
  %vm332 = vc.u32 %v324, %v328
  %v333 = vsel %vm332, 1, 0
  %v334 = vadd.s32 %v324, %v328
  %v335 = vadd.s32 %v327, %v333
  %vm336 = vc.u32 %v334, %v330
  %v337 = vsel %vm336, 1, 0
  %v338 = vadd.s32 %v334, %v330
  %v339 = vadd.s32 %v335, %v337
  %v340 = vadd.s32 %v339, %v329
  %v341 = vadd.s32 %v340, %v331
  %v342 = vmul.u32 %v297, %v288
  %v343 = vadd.s32 %v319, %v338
  %vm344 = vc.u32 %v319, %v338
  %v345 = vadd.s32 %v341, 1
  %v346 = vsel %vm344, %v345, %v341
  %v347 = vadd.s32 %v342, %v346
  %v348 = vadd.s32 %v347, 536870912
  %v349 = vshrl.u32 %v348, 30
  %v350 = vshll.u32 %v349, 30
  %v351 = vsub.s32 %v347, %v350
  %vm352 = vcmp.lt.s32.totalorder %v351, 0
  %v353 = vsub.s32 0, %v351
  %v354 = vsel %vm352, %v353, %v351
  %v355 = vclz %v354
  %v356 = vsub.s32 %v355, 2
  %vm357 = vcmp.gt.s32.totalorder 0, %v356
  %v358 = vsel %vm357, 0, %v356
  %v359 = vsub.s32 32, %v358
  %v360 = vshll.u32 %v351, %v358
  %v361 = vshrl.u32 %v343, %v359
  %v362 = vor.u32 %v360, %v361
  %v363 = vsub.s32 4294967266, %v358
  %v364 = vadd.s32 %v363, 127
  %v365 = vshll.u32 %v364, 23
  %v366 = vor.u32 4788187, %v365
  %v367 = vand.u32 2147483647, %v366
  %v369 = vcvt.s32.f32 %v362
  %v370 = vmul.f32 %v369, %v367
  %v371 = vxor.u32 %v370, 2147483648
  %v372 = vsel %vm251, %v371, %v370
  %v373 = vsub.s32 4, %v349
  %v374 = vsel %vm251, %v373, %v349
  %v375 = vsel %vm250, %v92, %v372
  %v376 = vsel %vm250, 0, %v374
  %v377 = vmul.f32 %v375, %v375
  %v378 = vmul.f32 %v377, -0.001358992
  %v379 = vadd.f32 %v378, 0.041655596
  %v380 = vmul.f32 %v377, %v379
  %v381 = vadd.f32 %v380, -0.4999988
  %v382 = vmul.f32 %v377, %v381
  %v383 = vadd.f32 1.0, %v382
  %v384 = vmul.f32 %v375, %v375
  %v385 = vmul.f32 %v384, -0.00019511016
  %v386 = vadd.f32 %v385, 0.008332121
  %v387 = vmul.f32 %v384, %v386
  %v388 = vadd.f32 %v387, -0.16666654
  %v389 = vmul.f32 %v384, %v388
  %v390 = vadd.f32 %v389, 1.0
  %v391 = vmul.f32 %v390, %v375
  %vm392 = vweird.f32 %v92
  %v393 = vand.u32 %v376, 3
  %vm394 = vcmp.lt.s32.totalorder %v393, 2
  %vm395 = vcmp.eq.s32.totalorder %v393, 0
  %v396 = vxor.u32 %v391, 2147483648
  %v397 = vsel %vm395, %v383, %v396
  %vm398 = vcmp.eq.s32.totalorder %v393, 2
  %v399 = vxor.u32 %v383, 2147483648
  %v400 = vsel %vm398, %v399, %v391
  %v401 = vsel %vm394, %v397, %v400
  %v402 = vsel %vm392, nan, %v401
  %v403 = vand.u32 2147483647, %v91
  %vm404 = vcmp.le.f32.partialorder %v403, 0.7853982
  %vm405 = vcmp.lt.s32.totalorder %v91, 0
  %v406 = vand.u32 %v91, 2139095040
  %v407 = vshrl.u32 %v406, 23
  %v408 = vsub.s32 %v407, 127
  %v409 = vand.u32 2147483647, %v91
  %v410 = vand.u32 %v409, 8388607
  %v411 = vor.u32 %v410, 8388608
  %v412 = vsub.s32 0, %v411
  %v413 = vadd.s32 %v408, 1
  %vm414 = vcmp.gt.s32.totalorder %v413, 0
  %v415 = vsel %vm414, %v413, 0
  %v416 = vshrl.u32 %v415, 5
  %v417 = vand.u32 %v415, 31
  %v418 = vsub.s32 32, %v417
  %v419 = vshrl.u32 683565275, %v418
  %v420 = vshll.u32 683565275, %v417
  %v421 = vshrl.u32 2475754826, %v418
  %v422 = vor.u32 %v420, %v421
  %v423 = vshll.u32 2475754826, %v417
  %v424 = vshrl.u32 2131351028, %v418
  %v425 = vor.u32 %v423, %v424
  %v426 = vshll.u32 2131351028, %v417
  %v427 = vshrl.u32 2102212464, %v418
  %v428 = vor.u32 %v426, %v427
  %v429 = vshll.u32 2102212464, %v417
  %v430 = vshrl.u32 920167782, %v418
  %v431 = vor.u32 %v429, %v430
  %v432 = vshll.u32 920167782, %v417
  %v433 = vshrl.u32 1326507024, %v418
  %v434 = vor.u32 %v432, %v433
  %vm435 = vcmp.lt.s32.totalorder %v416, 1
  %vm436 = vcmp.lt.s32.totalorder %v416, 2
  %vm437 = vcmp.lt.s32.totalorder %v416, 3
  %vm438 = vcmp.lt.s32.totalorder %v416, 4
  %v439 = vsel %vm435, %v419, %v422
  %v440 = vsel %vm438, %v428, 2102212464
  %v441 = vsel %vm437, %v425, %v440
  %v442 = vsel %vm436, %v439, %v441
  %v443 = vsel %vm435, %v422, %v425
  %v444 = vsel %vm438, %v431, 920167782
  %v445 = vsel %vm437, %v428, %v444
  %v446 = vsel %vm436, %v443, %v445
  %v447 = vsel %vm435, %v425, %v428
  %v448 = vsel %vm438, %v434, 1326507024
  %v449 = vsel %vm437, %v431, %v448
  %v450 = vsel %vm436, %v447, %v449
  %v451 = vshll.u32 %v411, 8
  %v452 = vand.u32 %v451, 65535
  %v453 = vshrl.u32 %v451, 16
  %v454 = vand.u32 %v450, 65535
  %v455 = vshrl.u32 %v450, 16
  %v456 = vmul.u32 %v452, %v454
  %v457 = vmul.u32 %v452, %v455
  %v458 = vmul.u32 %v453, %v454
  %v459 = vmul.u32 %v453, %v455
  %v460 = vshll.u32 %v457, 16
  %v461 = vshrl.u32 %v457, 16
  %v462 = vshll.u32 %v458, 16
  %v463 = vshrl.u32 %v458, 16
  %vm464 = vc.u32 %v456, %v460
  %v465 = vsel %vm464, 1, 0
  %v466 = vadd.s32 %v456, %v460
  %v467 = vadd.s32 %v459, %v465
  %vm468 = vc.u32 %v466, %v462
  %v469 = vsel %vm468, 1, 0
  %v470 = vadd.s32 %v466, %v462
  %v471 = vadd.s32 %v467, %v469
  %v472 = vadd.s32 %v471, %v461
  %v473 = vadd.s32 %v472, %v463
  %v474 = vand.u32 %v451, 65535
  %v475 = vshrl.u32 %v451, 16
  %v476 = vand.u32 %v446, 65535
  %v477 = vshrl.u32 %v446, 16
  %v478 = vmul.u32 %v474, %v476
  %v479 = vmul.u32 %v474, %v477
  %v480 = vmul.u32 %v475, %v476
  %v481 = vmul.u32 %v475, %v477
  %v482 = vshll.u32 %v479, 16
  %v483 = vshrl.u32 %v479, 16
  %v484 = vshll.u32 %v480, 16
  %v485 = vshrl.u32 %v480, 16
  %vm486 = vc.u32 %v478, %v482
  %v487 = vsel %vm486, 1, 0
  %v488 = vadd.s32 %v478, %v482
  %v489 = vadd.s32 %v481, %v487
  %vm490 = vc.u32 %v488, %v484
  %v491 = vsel %vm490, 1, 0
  %v492 = vadd.s32 %v488, %v484
  %v493 = vadd.s32 %v489, %v491
  %v494 = vadd.s32 %v493, %v483
  %v495 = vadd.s32 %v494, %v485
  %v496 = vmul.u32 %v451, %v442
  %v497 = vadd.s32 %v473, %v492
  %vm498 = vc.u32 %v473, %v492
  %v499 = vadd.s32 %v495, 1
  %v500 = vsel %vm498, %v499, %v495
  %v501 = vadd.s32 %v496, %v500
  %v502 = vadd.s32 %v501, 536870912
  %v503 = vshrl.u32 %v502, 30
  %v504 = vshll.u32 %v503, 30
  %v505 = vsub.s32 %v501, %v504
  %vm506 = vcmp.lt.s32.totalorder %v505, 0
  %v507 = vsub.s32 0, %v505
  %v508 = vsel %vm506, %v507, %v505
  %v509 = vclz %v508
  %v510 = vsub.s32 %v509, 2
  %vm511 = vcmp.gt.s32.totalorder 0, %v510
  %v512 = vsel %vm511, 0, %v510
  %v513 = vsub.s32 32, %v512
  %v514 = vshll.u32 %v505, %v512
  %v515 = vshrl.u32 %v497, %v513
  %v516 = vor.u32 %v514, %v515
  %v517 = vsub.s32 4294967266, %v512
  %v518 = vadd.s32 %v517, 127
  %v519 = vshll.u32 %v518, 23
  %v520 = vor.u32 4788187, %v519
  %v521 = vand.u32 2147483647, %v520
  %v523 = vcvt.s32.f32 %v516
  %v524 = vmul.f32 %v523, %v521
  %v525 = vxor.u32 %v524, 2147483648
  %v526 = vsel %vm405, %v525, %v524
  %v527 = vsub.s32 4, %v503
  %v528 = vsel %vm405, %v527, %v503
  %v529 = vsel %vm404, %v91, %v526
  %v530 = vsel %vm404, 0, %v528
  %v531 = vmul.f32 %v529, %v529
  %v532 = vmul.f32 %v531, -0.001358992
  %v533 = vadd.f32 %v532, 0.041655596
  %v534 = vmul.f32 %v531, %v533
  %v535 = vadd.f32 %v534, -0.4999988
  %v536 = vmul.f32 %v531, %v535
  %v537 = vadd.f32 1.0, %v536
  %v538 = vmul.f32 %v529, %v529
  %v539 = vmul.f32 %v538, -0.00019511016
  %v540 = vadd.f32 %v539, 0.008332121
  %v541 = vmul.f32 %v538, %v540
  %v542 = vadd.f32 %v541, -0.16666654
  %v543 = vmul.f32 %v538, %v542
  %v544 = vadd.f32 %v543, 1.0
  %v545 = vmul.f32 %v544, %v529
  %vm546 = vweird.f32 %v91
  %v547 = vadd.s32 %v530, 3
  %v548 = vand.u32 %v547, 3
  %vm549 = vcmp.lt.s32.totalorder %v548, 2
  %vm550 = vcmp.eq.s32.totalorder %v548, 0
  %v551 = vxor.u32 %v545, 2147483648
  %v552 = vsel %vm550, %v537, %v551
  %vm553 = vcmp.eq.s32.totalorder %v548, 2
  %v554 = vxor.u32 %v537, 2147483648
  %v555 = vsel %vm553, %v554, %v545
  %v556 = vsel %vm549, %v552, %v555
  %v557 = vsel %vm546, nan, %v556
  %v558 = vand.u32 2147483647, %v92
  %vm559 = vcmp.le.f32.partialorder %v558, 0.7853982
  %vm560 = vcmp.lt.s32.totalorder %v92, 0
  %v561 = vand.u32 %v92, 2139095040
  %v562 = vshrl.u32 %v561, 23
  %v563 = vsub.s32 %v562, 127
  %v564 = vand.u32 2147483647, %v92
  %v565 = vand.u32 %v564, 8388607
  %v566 = vor.u32 %v565, 8388608
  %v567 = vsub.s32 0, %v566
  %v568 = vadd.s32 %v563, 1
  %vm569 = vcmp.gt.s32.totalorder %v568, 0
  %v570 = vsel %vm569, %v568, 0
  %v571 = vshrl.u32 %v570, 5
  %v572 = vand.u32 %v570, 31
  %v573 = vsub.s32 32, %v572
  %v574 = vshrl.u32 683565275, %v573
  %v575 = vshll.u32 683565275, %v572
  %v576 = vshrl.u32 2475754826, %v573
  %v577 = vor.u32 %v575, %v576
  %v578 = vshll.u32 2475754826, %v572
  %v579 = vshrl.u32 2131351028, %v573
  %v580 = vor.u32 %v578, %v579
  %v581 = vshll.u32 2131351028, %v572
  %v582 = vshrl.u32 2102212464, %v573
  %v583 = vor.u32 %v581, %v582
  %v584 = vshll.u32 2102212464, %v572
  %v585 = vshrl.u32 920167782, %v573
  %v586 = vor.u32 %v584, %v585
  %v587 = vshll.u32 920167782, %v572
  %v588 = vshrl.u32 1326507024, %v573
  %v589 = vor.u32 %v587, %v588
  %vm590 = vcmp.lt.s32.totalorder %v571, 1
  %vm591 = vcmp.lt.s32.totalorder %v571, 2
  %vm592 = vcmp.lt.s32.totalorder %v571, 3
  %vm593 = vcmp.lt.s32.totalorder %v571, 4
  %v594 = vsel %vm590, %v574, %v577
  %v595 = vsel %vm593, %v583, 2102212464
  %v596 = vsel %vm592, %v580, %v595
  %v597 = vsel %vm591, %v594, %v596
  %v598 = vsel %vm590, %v577, %v580
  %v599 = vsel %vm593, %v586, 920167782
  %v600 = vsel %vm592, %v583, %v599
  %v601 = vsel %vm591, %v598, %v600
  %v602 = vsel %vm590, %v580, %v583
  %v603 = vsel %vm593, %v589, 1326507024
  %v604 = vsel %vm592, %v586, %v603
  %v605 = vsel %vm591, %v602, %v604
  %v606 = vshll.u32 %v566, 8
  %v607 = vand.u32 %v606, 65535
  %v608 = vshrl.u32 %v606, 16
  %v609 = vand.u32 %v605, 65535
  %v610 = vshrl.u32 %v605, 16
  %v611 = vmul.u32 %v607, %v609
  %v612 = vmul.u32 %v607, %v610
  %v613 = vmul.u32 %v608, %v609
  %v614 = vmul.u32 %v608, %v610
  %v615 = vshll.u32 %v612, 16
  %v616 = vshrl.u32 %v612, 16
  %v617 = vshll.u32 %v613, 16
  %v618 = vshrl.u32 %v613, 16
  %vm619 = vc.u32 %v611, %v615
  %v620 = vsel %vm619, 1, 0
  %v621 = vadd.s32 %v611, %v615
  %v622 = vadd.s32 %v614, %v620
  %vm623 = vc.u32 %v621, %v617
  %v624 = vsel %vm623, 1, 0
  %v625 = vadd.s32 %v621, %v617
  %v626 = vadd.s32 %v622, %v624
  %v627 = vadd.s32 %v626, %v616
  %v628 = vadd.s32 %v627, %v618
  %v629 = vand.u32 %v606, 65535
  %v630 = vshrl.u32 %v606, 16
  %v631 = vand.u32 %v601, 65535
  %v632 = vshrl.u32 %v601, 16
  %v633 = vmul.u32 %v629, %v631
  %v634 = vmul.u32 %v629, %v632
  %v635 = vmul.u32 %v630, %v631
  %v636 = vmul.u32 %v630, %v632
  %v637 = vshll.u32 %v634, 16
  %v638 = vshrl.u32 %v634, 16
  %v639 = vshll.u32 %v635, 16
  %v640 = vshrl.u32 %v635, 16
  %vm641 = vc.u32 %v633, %v637
  %v642 = vsel %vm641, 1, 0
  %v643 = vadd.s32 %v633, %v637
  %v644 = vadd.s32 %v636, %v642
  %vm645 = vc.u32 %v643, %v639
  %v646 = vsel %vm645, 1, 0
  %v647 = vadd.s32 %v643, %v639
  %v648 = vadd.s32 %v644, %v646
  %v649 = vadd.s32 %v648, %v638
  %v650 = vadd.s32 %v649, %v640
  %v651 = vmul.u32 %v606, %v597
  %v652 = vadd.s32 %v628, %v647
  %vm653 = vc.u32 %v628, %v647
  %v654 = vadd.s32 %v650, 1
  %v655 = vsel %vm653, %v654, %v650
  %v656 = vadd.s32 %v651, %v655
  %v657 = vadd.s32 %v656, 536870912
  %v658 = vshrl.u32 %v657, 30
  %v659 = vshll.u32 %v658, 30
  %v660 = vsub.s32 %v656, %v659
  %vm661 = vcmp.lt.s32.totalorder %v660, 0
  %v662 = vsub.s32 0, %v660
  %v663 = vsel %vm661, %v662, %v660
  %v664 = vclz %v663
  %v665 = vsub.s32 %v664, 2
  %vm666 = vcmp.gt.s32.totalorder 0, %v665
  %v667 = vsel %vm666, 0, %v665
  %v668 = vsub.s32 32, %v667
  %v669 = vshll.u32 %v660, %v667
  %v670 = vshrl.u32 %v652, %v668
  %v671 = vor.u32 %v669, %v670
  %v672 = vsub.s32 4294967266, %v667
  %v673 = vadd.s32 %v672, 127
  %v674 = vshll.u32 %v673, 23
  %v675 = vor.u32 4788187, %v674
  %v676 = vand.u32 2147483647, %v675
  %v678 = vcvt.s32.f32 %v671
  %v679 = vmul.f32 %v678, %v676
  %v680 = vxor.u32 %v679, 2147483648
  %v681 = vsel %vm560, %v680, %v679
  %v682 = vsub.s32 4, %v658
  %v683 = vsel %vm560, %v682, %v658
  %v684 = vsel %vm559, %v92, %v681
  %v685 = vsel %vm559, 0, %v683
  %v686 = vmul.f32 %v684, %v684
  %v687 = vmul.f32 %v686, -0.001358992
  %v688 = vadd.f32 %v687, 0.041655596
  %v689 = vmul.f32 %v686, %v688
  %v690 = vadd.f32 %v689, -0.4999988
  %v691 = vmul.f32 %v686, %v690
  %v692 = vadd.f32 1.0, %v691
  %v693 = vmul.f32 %v684, %v684
  %v694 = vmul.f32 %v693, -0.00019511016
  %v695 = vadd.f32 %v694, 0.008332121
  %v696 = vmul.f32 %v693, %v695
  %v697 = vadd.f32 %v696, -0.16666654
  %v698 = vmul.f32 %v693, %v697
  %v699 = vadd.f32 %v698, 1.0
  %v700 = vmul.f32 %v699, %v684
  %vm701 = vweird.f32 %v92
  %v702 = vadd.s32 %v685, 3
  %v703 = vand.u32 %v702, 3
  %vm704 = vcmp.lt.s32.totalorder %v703, 2
  %vm705 = vcmp.eq.s32.totalorder %v703, 0
  %v706 = vxor.u32 %v700, 2147483648
  %v707 = vsel %vm705, %v692, %v706
  %vm708 = vcmp.eq.s32.totalorder %v703, 2
  %v709 = vxor.u32 %v692, 2147483648
  %v710 = vsel %vm708, %v709, %v700
  %v711 = vsel %vm704, %v707, %v710
  %v712 = vsel %vm701, nan, %v711
  %v713 = vsel %vm94, 1, 0
  %v714 = vperm.slane %v713, 0
  %vm715 = vcmp.eq.s32.totalorder %v714, 1
  %v716 = vsel %vm715, %v248, %v557
  %v717 = vsel %vm715, %v402, %v712
  %v718 = vld [vmem:[%s2] sm:$0x1]
  %vm719 = vcmp.ne.f32.partialorder %v718, 0.0
  %v720 = vsel %vm719, 1, 0
  %v721 = vperm.slane %v720, 0
  %vm722 = vcmp.eq.s32.totalorder %v721, 1
  %v723 = vsel %vm722, %v85, %v716
  %v724 = vsel %vm722, %v86, %v717
  %v725 = vld [vmem:[%s4] sm:$0xff]
  %v726 = vld [vmem:[%s4 + $0x8] sm:$0xff]
  %v727 = vld [vmem:[%s4 + $0x10] sm:$0xff]
  %v728 = vld [vmem:[%s4 + $0x18] sm:$0xff]
  %v729 = vld [vmem:[%s4 + $0x20] sm:$0xff]
  %v730 = vld [vmem:[%s4 + $0x28] sm:$0xff]
  %v731 = vld [vmem:[%s4 + $0x30] sm:$0xff]
  %v732 = vld [vmem:[%s4 + $0x38] sm:$0xff]
  %v733 = vld [vmem:[%s5] sm:$0x1]
  %v735 = vperm.slane %v733, 0
  %vm737 = vcmask 523264
  %v739 = vsel %vm737, %v723, 0
  %v742 = vsel %vm737, %v724, 0
  %744 = vmatpush.msra.mxu0 0.0
  %745 = vmatpush.msra.mxu0 0.0
  %746 = vmatpush.msra.mxu0 0.0
  %747 = vmatpush.msra.mxu0 0.0
  %748 = vmatpush.msra.mxu0 0.0
  %749 = vmatpush.msra.mxu0 0.0
  %750 = vmatpush.msra.mxu0 0.0
  %751 = vmatpush.msra.mxu0 0.0
  %752 = vmatpush.msra.mxu0 %v732
  %753 = vmatpush.msra.mxu0 %v731
  %754 = vmatpush.msra.mxu0 %v730
  %755 = vmatpush.msra.mxu0 %v729
  %756 = vmatpush.msra.mxu0 %v728
  %757 = vmatpush.msra.mxu0 %v727
  %758 = vmatpush.msra.mxu0 %v726
  %759 = vmatpush.msra.mxu0 %v725
  %760 = vmatmul.f32.gmra.mxu0 %v739
  %v761 = vpop.f32.mrf.mxu0
  %v762 = vadd.f32 %v735, %v761
  %763 = vmatmul.f32.gmra.mxu0 %v742
  %v764 = vpop.f32.mrf.mxu0
  %v765 = vadd.f32 %v735, %v764
  %766 = vdwg.mxu0
  %vm767 = vcmp.ge.f32.partialorder %v762, 0.0
  %vm768 = vcmp.ge.f32.partialorder %v765, 0.0
  %v769 = vmul.f32 %v762, 0.2
  %v770 = vmul.f32 %v765, 0.2
  %v771 = vsel %vm767, %v762, %v769
  %v772 = vsel %vm768, %v765, %v770
  %v773 = vld [vmem:[%s6] sm:$0xff]
  %v774 = vld [vmem:[%s6 + $0x8] sm:$0xff]
  %v775 = vld [vmem:[%s6 + $0x10] sm:$0xff]
  %v776 = vld [vmem:[%s6 + $0x18] sm:$0xff]
  %v777 = vld [vmem:[%s6 + $0x20] sm:$0xff]
  %v778 = vld [vmem:[%s6 + $0x28] sm:$0xff]
  %v779 = vld [vmem:[%s6 + $0x30] sm:$0xff]
  %v780 = vld [vmem:[%s6 + $0x38] sm:$0xff]
  %v781 = vld [vmem:[%s6 + $0x40] sm:$0xff]
  %v782 = vld [vmem:[%s6 + $0x48] sm:$0xff]
  %v783 = vld [vmem:[%s6 + $0x50] sm:$0xff]
  %v784 = vld [vmem:[%s6 + $0x58] sm:$0xff]
  %v785 = vld [vmem:[%s6 + $0x60] sm:$0xff]
  %v786 = vld [vmem:[%s6 + $0x68] sm:$0xff]
  %v787 = vld [vmem:[%s6 + $0x70] sm:$0xff]
  %v788 = vld [vmem:[%s6 + $0x78] sm:$0xff]
  %v789 = vld [vmem:[%s7] sm:$0x1]
  %v791 = vperm.slane %v789, 0
  %793 = vmatpush.msra.mxu0 %v788
  %794 = vmatpush.msra.mxu0 %v787
  %795 = vmatpush.msra.mxu0 %v786
  %796 = vmatpush.msra.mxu0 %v785
  %797 = vmatpush.msra.mxu0 %v784
  %798 = vmatpush.msra.mxu0 %v783
  %799 = vmatpush.msra.mxu0 %v782
  %800 = vmatpush.msra.mxu0 %v781
  %801 = vmatpush.msra.mxu0 %v780
  %802 = vmatpush.msra.mxu0 %v779
  %803 = vmatpush.msra.mxu0 %v778
  %804 = vmatpush.msra.mxu0 %v777
  %805 = vmatpush.msra.mxu0 %v776
  %806 = vmatpush.msra.mxu0 %v775
  %807 = vmatpush.msra.mxu0 %v774
  %808 = vmatpush.msra.mxu0 %v773
  %809 = vmatmul.f32.gmra.mxu0 %v771
  %v810 = vpop.f32.mrf.mxu0
  %v811 = vadd.f32 %v791, %v810
  %812 = vmatmul.f32.gmra.mxu0 %v772
  %v813 = vpop.f32.mrf.mxu0
  %v814 = vadd.f32 %v791, %v813
  %815 = vdwg.mxu0
  %vm816 = vcmp.ge.f32.partialorder %v811, 0.0
  %vm817 = vcmp.ge.f32.partialorder %v814, 0.0
  %v818 = vmul.f32 %v811, 0.2
  %v819 = vmul.f32 %v814, 0.2
  %v820 = vsel %vm816, %v811, %v818
  %v821 = vsel %vm817, %v814, %v819
  %v822 = vld [vmem:[%s8] sm:$0xff]
  %v823 = vld [vmem:[%s8 + $0x8] sm:$0xff]
  %v824 = vld [vmem:[%s8 + $0x10] sm:$0xff]
  %v825 = vld [vmem:[%s8 + $0x18] sm:$0xff]
  %v826 = vld [vmem:[%s8 + $0x20] sm:$0xff]
  %v827 = vld [vmem:[%s8 + $0x28] sm:$0xff]
  %v828 = vld [vmem:[%s8 + $0x30] sm:$0xff]
  %v829 = vld [vmem:[%s8 + $0x38] sm:$0xff]
  %v830 = vld [vmem:[%s8 + $0x40] sm:$0xff]
  %v831 = vld [vmem:[%s8 + $0x48] sm:$0xff]
  %v832 = vld [vmem:[%s8 + $0x50] sm:$0xff]
  %v833 = vld [vmem:[%s8 + $0x58] sm:$0xff]
  %v834 = vld [vmem:[%s8 + $0x60] sm:$0xff]
  %v835 = vld [vmem:[%s8 + $0x68] sm:$0xff]
  %v836 = vld [vmem:[%s8 + $0x70] sm:$0xff]
  %v837 = vld [vmem:[%s8 + $0x78] sm:$0xff]
  %v838 = vld [vmem:[%s9] sm:$0x1]
  %v840 = vperm.slane %v838, 0
  %842 = vmatpush.msra.mxu0 %v837
  %843 = vmatpush.msra.mxu0 %v836
  %844 = vmatpush.msra.mxu0 %v835
  %845 = vmatpush.msra.mxu0 %v834
  %846 = vmatpush.msra.mxu0 %v833
  %847 = vmatpush.msra.mxu0 %v832
  %848 = vmatpush.msra.mxu0 %v831
  %849 = vmatpush.msra.mxu0 %v830
  %850 = vmatpush.msra.mxu0 %v829
  %851 = vmatpush.msra.mxu0 %v828
  %852 = vmatpush.msra.mxu0 %v827
  %853 = vmatpush.msra.mxu0 %v826
  %854 = vmatpush.msra.mxu0 %v825
  %855 = vmatpush.msra.mxu0 %v824
  %856 = vmatpush.msra.mxu0 %v823
  %857 = vmatpush.msra.mxu0 %v822
  %858 = vmatmul.f32.gmra.mxu0 %v820
  %v859 = vpop.f32.mrf.mxu0
  %v860 = vadd.f32 %v840, %v859
  %861 = vmatmul.f32.gmra.mxu0 %v821
  %v862 = vpop.f32.mrf.mxu0
  %v863 = vadd.f32 %v840, %v862
  %864 = vdwg.mxu0
  %vm865 = vcmp.ge.f32.partialorder %v860, 0.0
  %vm866 = vcmp.ge.f32.partialorder %v863, 0.0
  %v867 = vmul.f32 %v860, 0.2
  %v868 = vmul.f32 %v863, 0.2
  %v869 = vsel %vm865, %v860, %v867
  %v870 = vsel %vm866, %v863, %v868
  %v871 = vld [vmem:[%s10] sm:$0xff]
  %v872 = vld [vmem:[%s10 + $0x8] sm:$0xff]
  %v873 = vld [vmem:[%s10 + $0x10] sm:$0xff]
  %v874 = vld [vmem:[%s10 + $0x18] sm:$0xff]
  %v875 = vld [vmem:[%s10 + $0x20] sm:$0xff]
  %v876 = vld [vmem:[%s10 + $0x28] sm:$0xff]
  %v877 = vld [vmem:[%s10 + $0x30] sm:$0xff]
  %v878 = vld [vmem:[%s10 + $0x38] sm:$0xff]
  %v879 = vld [vmem:[%s10 + $0x40] sm:$0xff]
  %v880 = vld [vmem:[%s10 + $0x48] sm:$0xff]
  %v881 = vld [vmem:[%s10 + $0x50] sm:$0xff]
  %v882 = vld [vmem:[%s10 + $0x58] sm:$0xff]
  %v883 = vld [vmem:[%s10 + $0x60] sm:$0xff]
  %v884 = vld [vmem:[%s10 + $0x68] sm:$0xff]
  %v885 = vld [vmem:[%s10 + $0x70] sm:$0xff]
  %v886 = vld [vmem:[%s10 + $0x78] sm:$0xff]
  %v887 = vld [vmem:[%s11] sm:$0x1]
  %v889 = vperm.slane %v887, 0
  %891 = vmatpush.msra.mxu0 %v886
  %892 = vmatpush.msra.mxu0 %v885
  %893 = vmatpush.msra.mxu0 %v884
  %894 = vmatpush.msra.mxu0 %v883
  %895 = vmatpush.msra.mxu0 %v882
  %896 = vmatpush.msra.mxu0 %v881
  %897 = vmatpush.msra.mxu0 %v880
  %898 = vmatpush.msra.mxu0 %v879
  %899 = vmatpush.msra.mxu0 %v878
  %900 = vmatpush.msra.mxu0 %v877
  %901 = vmatpush.msra.mxu0 %v876
  %902 = vmatpush.msra.mxu0 %v875
  %903 = vmatpush.msra.mxu0 %v874
  %904 = vmatpush.msra.mxu0 %v873
  %905 = vmatpush.msra.mxu0 %v872
  %906 = vmatpush.msra.mxu0 %v871
  %907 = vmatmul.f32.gmra.mxu0 %v869
  %v908 = vpop.f32.mrf.mxu0
  %v909 = vadd.f32 %v889, %v908
  %910 = vmatmul.f32.gmra.mxu0 %v870
  %v911 = vpop.f32.mrf.mxu0
  %v912 = vadd.f32 %v889, %v911
  %913 = vdwg.mxu0
  %914 = vst [vmem:[%s12] sm:$0xff] %v909
  %915 = vst [vmem:[%s12 + $0x8] sm:$0xff] %v912
  // Predicated region
  $region50: #{mlp_forward.1} parent=0 // pred_check
    _
  $region51: #{mlp_forward.1} parent=0 // pred_check_branch
    %917 = sbr.rel (0) target = $region53
  $region52: #{mlp_forward.1} parent=0 // pred_region
    _
  $region53: #{mlp_forward.1} parent=0 // pred_fallthru
    _
  // Predicated region
  $region54: #{mlp_forward.1} parent=0 // pred_check
    _
  $region55: #{mlp_forward.1} parent=0 // pred_check_branch
    %919 = sbr.rel (0) target = $region57
  $region56: #{mlp_forward.1} parent=0 // pred_region
    _
  $region57: #{mlp_forward.1} parent=0 // pred_fallthru
    _

</llo_original>
